<compile_context>
chip_gen: v6e
topology: v6e:2x2x1
jax: 0.10.0
libtpu: 0.0.40
codegen_flags: <defaults>
</compile_context>

<pallas_src>
import functools
import math

import jax
import jax.numpy as jnp
from jax import lax
from jax.experimental import pallas as pl
from jax.experimental.pallas import tpu as pltpu

_VMEM_LIMIT = 32 * 1024 * 1024  # explicit, safe on v5e/v6e/v7x


# ----------------------------------------------------------------------------
# Kernel 1/3: fused linear  out = x @ W + b  (row-tiled, bf16 MXU, f32 acc)
# ----------------------------------------------------------------------------
def _linear_kernel(x_ref, w_ref, b_ref, o_ref):
    x = x_ref[...].astype(jnp.bfloat16)                        # (tm, K) bf16
    acc = jnp.dot(x, w_ref[...], preferred_element_type=jnp.float32)
    o_ref[...] = (acc + b_ref[...]).astype(o_ref.dtype)


def _linear(x, w_bf16, b, *, out_dtype, tm):
    """x: (M, K); w_bf16: (K, N) bf16; b: (N,). Returns (M, N) in out_dtype."""
    M, K = x.shape
    K2, N = w_bf16.shape
    assert K == K2 and M % tm == 0
    b2 = b.reshape(1, N).astype(jnp.float32)

    flops = 2 * M * K * N
    bytes_accessed = (M * K * x.dtype.itemsize + K * N * 2 + N * 4
                      + M * N * jnp.dtype(out_dtype).itemsize)

    return pl.pallas_call(
        _linear_kernel,
        out_shape=jax.ShapeDtypeStruct((M, N), out_dtype),
        grid_spec=pltpu.PrefetchScalarGridSpec(
            num_scalar_prefetch=0,
            grid=(M // tm,),
            in_specs=[
                pl.BlockSpec((tm, K), lambda i: (i, 0)),   # x row tile
                pl.BlockSpec((K, N), lambda i: (0, 0)),    # W (grid-invariant)
                pl.BlockSpec((1, N), lambda i: (0, 0)),    # b (grid-invariant)
            ],
            out_specs=pl.BlockSpec((tm, N), lambda i: (i, 0)),
        ),
        compiler_params=pltpu.CompilerParams(
            dimension_semantics=("parallel",),
            vmem_limit_bytes=_VMEM_LIMIT),
        cost_estimate=pl.CostEstimate(
            flops=flops, transcendentals=0, bytes_accessed=bytes_accessed),
    )(x, w_bf16, b2)


# ----------------------------------------------------------------------------
# Kernel 2/3: flash attention over head-major (B*H, T, hd) tensors
# ----------------------------------------------------------------------------
def _flash_kernel(q_ref, k_ref, v_ref, o_ref, m_sc, l_sc, acc_sc,
                  *, tq, tk, hd, scale):
    qi = pl.program_id(1)
    ki = pl.program_id(2)

    @pl.when(ki == 0)
    def _():
        m_sc[...] = jnp.full((tq, 1), -jnp.inf, dtype=jnp.float32)
        l_sc[...] = jnp.zeros((tq, 1), dtype=jnp.float32)
        acc_sc[...] = jnp.zeros((tq, hd), dtype=jnp.float32)

    # Causal block skipping: KV blocks strictly above the diagonal contribute
    # nothing (kv_start > q_end) -> skip both matmuls and the exp().
    @pl.when(ki * tk <= qi * tq + (tq - 1))
    def _():
        q = q_ref[...]                                           # (tq, hd) bf16
        k = k_ref[...]                                           # (tk, hd) bf16
        # QK^T without materializing a transpose: contract head dim of both.
        s = lax.dot_general(q, k, (((1,), (1,)), ((), ())),
                            preferred_element_type=jnp.float32) * scale
        row = qi * tq + lax.broadcasted_iota(jnp.int32, (tq, tk), 0)
        col = ki * tk + lax.broadcasted_iota(jnp.int32, (tq, tk), 1)
        s = jnp.where(row >= col, s, jnp.float32(-1e30))

        m_prev = m_sc[...]
        m_new = jnp.maximum(m_prev, s.max(axis=-1, keepdims=True))
        alpha = jnp.exp(m_prev - m_new)                          # f32 softmax math
        p = jnp.exp(s - m_new)
        l_sc[...] = alpha * l_sc[...] + p.sum(axis=-1, keepdims=True)
        acc_sc[...] = alpha * acc_sc[...] + jnp.dot(
            p.astype(jnp.bfloat16), v_ref[...],
            preferred_element_type=jnp.float32)
        m_sc[...] = m_new

    @pl.when(ki == pl.num_programs(2) - 1)
    def _():
        inv_l = pl.reciprocal(l_sc[...], approx=True)            # EUP vrcp
        o_ref[...] = (acc_sc[...] * inv_l).astype(o_ref.dtype)


def _flash_attention(q, k, v, *, tq, tk):
    """q, k, v: (BH, T, hd) bf16. Returns (BH, T, hd) bf16."""
    BH, T, hd = q.shape
    assert T % tq == 0 and T % tk == 0
    scale = 1.0 / math.sqrt(hd)
    nq, nk = T // tq, T // tk

    kernel = functools.partial(_flash_kernel, tq=tq, tk=tk, hd=hd, scale=scale)
    flops = 4 * BH * T * T * hd            # QK^T + AV (upper bound pre-skip)
    transcendentals = BH * T * T
    bytes_accessed = 4 * BH * T * hd * 2   # q, k, v, o in bf16

    return pl.pallas_call(
        kernel,
        out_shape=jax.ShapeDtypeStruct((BH, T, hd), q.dtype),
        grid_spec=pltpu.PrefetchScalarGridSpec(
            num_scalar_prefetch=0,
            grid=(BH, nq, nk),
            in_specs=[
                pl.BlockSpec((None, tq, hd), lambda b, i, j: (b, i, 0)),
                pl.BlockSpec((None, tk, hd), lambda b, i, j: (b, j, 0)),
                pl.BlockSpec((None, tk, hd), lambda b, i, j: (b, j, 0)),
            ],
            out_specs=pl.BlockSpec((None, tq, hd), lambda b, i, j: (b, i, 0)),
            scratch_shapes=[
                pltpu.VMEM((tq, 1), jnp.float32),    # running max
                pltpu.VMEM((tq, 1), jnp.float32),    # running denom
                pltpu.VMEM((tq, hd), jnp.float32),   # output accumulator
            ],
        ),
        compiler_params=pltpu.CompilerParams(
            dimension_semantics=("parallel", "parallel", "arbitrary"),
            vmem_limit_bytes=_VMEM_LIMIT),
        cost_estimate=pl.CostEstimate(
            flops=flops, transcendentals=transcendentals,
            bytes_accessed=bytes_accessed),
    )(q, k, v)


# ----------------------------------------------------------------------------
# Full module forward
# ----------------------------------------------------------------------------
def causal_self_attention(x, w_qkv, b_qkv, w_proj, b_proj, n_head):
    """x: (B, T, C) f32; w_qkv: (C, 3C); b_qkv: (3C,); w_proj: (C, C); b_proj: (C,)."""
    B, T, C = x.shape
    assert C % n_head == 0
    hd = C // n_head
    M = B * T

    w_qkv_bf16 = w_qkv.astype(jnp.bfloat16)
    w_proj_bf16 = w_proj.astype(jnp.bfloat16)

    # Row-tile for the projection matmuls (big tiles -> few grid steps).
    tm = 256 if M % 256 == 0 else (128 if M % 128 == 0 else M)
    tq = 128 if T % 128 == 0 else T
    tk = tq

    # 1) QKV projection (bf16 intermediate halves HBM traffic between kernels).
    x2 = x.reshape(M, C)
    qkv = _linear(x2, w_qkv_bf16, b_qkv, out_dtype=jnp.bfloat16, tm=tm)  # (M, 3C)

    # Head-major layout glue (XLA reshapes/transposes, not inside the kernels).
    qkv = qkv.reshape(B, T, 3, n_head, hd)
    qkv = qkv.transpose(2, 0, 3, 1, 4).reshape(3, B * n_head, T, hd)
    q, k, v = qkv[0], qkv[1], qkv[2]

    # 2) Flash attention (causal, online softmax).
    y = _flash_attention(q, k, v, tq=tq, tk=tk)                  # (B*H, T, hd)

    # Merge heads back: (B*H, T, hd) -> (M, C).
    y = y.reshape(B, n_head, T, hd).transpose(0, 2, 1, 3).reshape(M, C)

    # 3) Output projection.
    out = _linear(y, w_proj_bf16, b_proj, out_dtype=x.dtype, tm=tm)
    return out.reshape(B, T, C)


def reference_attention(x, w_qkv, b_qkv, w_proj, b_proj, n_head):
    """Pure-JAX f32 reference mirroring the PyTorch forward."""
    B, T, C = x.shape
    hd = C // n_head
    qkv = x @ w_qkv + b_qkv
    q, k, v = jnp.split(qkv, 3, axis=-1)
    q = q.reshape(B, T, n_head, hd).transpose(0, 2, 1, 3)
    k = k.reshape(B, T, n_head, hd).transpose(0, 2, 1, 3)
    v = v.reshape(B, T, n_head, hd).transpose(0, 2, 1, 3)
    att = jnp.einsum('bhqd,bhkd->bhqk', q, k) / jnp.sqrt(jnp.float32(hd))
    mask = jnp.tril(jnp.ones((T, T), dtype=bool))
    att = jnp.where(mask, att, jnp.float32(-1e30))
    att = jax.nn.softmax(att, axis=-1)
    y = jnp.einsum('bhqk,bhkd->bhqd', att, v)
    y = y.transpose(0, 2, 1, 3).reshape(B, T, C)
    return y @ w_proj + b_proj


if __name__ == "__main__":
    # Small GPT2-like config: n_embd=128, n_head=4, seq=128, batch=2.
    B, T, C, N_HEAD = 2, 128, 128, 4

    key = jax.random.PRNGKey(0)
    kx, kw1, kb1, kw2, kb2 = jax.random.split(key, 5)

    x = jax.random.normal(kx, (B, T, C), dtype=jnp.float32)
    w_qkv = 0.02 * jax.random.normal(kw1, (C, 3 * C), dtype=jnp.float32)
    b_qkv = 0.02 * jax.random.normal(kb1, (3 * C,), dtype=jnp.float32)
    w_proj = 0.02 * jax.random.normal(kw2, (C, C), dtype=jnp.float32)
    b_proj = 0.02 * jax.random.normal(kb2, (C,), dtype=jnp.float32)

    out = causal_self_attention(x, w_qkv, b_qkv, w_proj, b_proj, N_HEAD)
    out = jax.block_until_ready(out)

    ref = reference_attention(x, w_qkv, b_qkv, w_proj, b_proj, N_HEAD)
    assert out.shape == (B, T, C)
    # bf16 MXU operands + approx reciprocal -> ~1e-2 level tolerance vs f32 ref.
    assert jnp.allclose(out, ref, atol=2e-2, rtol=2e-2)

    print("KERNEL_OK")
</pallas_src>

<mosaic_0001>
module attributes {stable_mosaic.version = 11 : i64} {
  func.func @_linear_kernel(%arg0: i32, %arg1: memref<256x128xf32, #tpu.memory_space<vmem>>, %arg2: memref<128x384xbf16, #tpu.memory_space<vmem>>, %arg3: memref<1x384xf32, #tpu.memory_space<vmem>>, %arg4: memref<256x384xbf16, #tpu.memory_space<vmem>>) attributes {dimension_semantics = [#tpu.dimension_semantics<parallel>], iteration_bounds = array<i64: 1>, scalar_prefetch = 0 : i64, scratch_operands = 0 : i64, tpu.core_type = #tpu.core_type<tc>, window_params = [{transform_indices = @transform_0, window_bounds = array<i64: 256, 128>}, {pipeline_mode = #tpu.pipeline_mode<synchronous>, transform_indices = @transform_1, window_bounds = array<i64: 128, 384>}, {pipeline_mode = #tpu.pipeline_mode<synchronous>, transform_indices = @transform_2, window_bounds = array<i64: 1, 384>}, {transform_indices = @transform_3, window_bounds = array<i64: 256, 384>}]} {
    %c0 = arith.constant 0 : index
    %c0_0 = arith.constant 0 : index
    %0 = vector.load %arg1[%c0, %c0_0] : memref<256x128xf32, #tpu.memory_space<vmem>>, vector<256x128xf32>
    %1 = arith.truncf %0 : vector<256x128xf32> to vector<256x128xbf16>
    %c0_1 = arith.constant 0 : index
    %c0_2 = arith.constant 0 : index
    %2 = vector.load %arg2[%c0_1, %c0_2] : memref<128x384xbf16, #tpu.memory_space<vmem>>, vector<128x384xbf16>
    %cst = arith.constant dense<0.000000e+00> : vector<256x384xf32>
    %3 = tpu.matmul %1, %2, %cst {dimension_numbers = #tpu.dot_dimension_numbers<[1], [0], [0], [1], [0, 0, 1, 1], [], []>} : vector<256x128xbf16>, vector<128x384xbf16>, vector<256x384xf32> -> vector<256x384xf32>
    %c0_3 = arith.constant 0 : index
    %c0_4 = arith.constant 0 : index
    %4 = vector.load %arg3[%c0_3, %c0_4] : memref<1x384xf32, #tpu.memory_space<vmem>>, vector<1x384xf32>
    %5 = vector.broadcast %4 : vector<1x384xf32> to vector<256x384xf32>
    %6 = arith.addf %3, %5 : vector<256x384xf32>
    %7 = arith.truncf %6 : vector<256x384xf32> to vector<256x384xbf16>
    %c0_5 = arith.constant 0 : index
    %c0_6 = arith.constant 0 : index
    %8 = vector.load %arg4[%c0_5, %c0_6] : memref<256x384xbf16, #tpu.memory_space<vmem>>, vector<256x384xbf16>
    tpu.vector_store %arg4[%c0_5, %c0_6], %7 {strides = array<i32>} : memref<256x384xbf16, #tpu.memory_space<vmem>>, vector<256x384xbf16>,
    return
  }
  func.func @transform_0(%arg0: i32) -> (i32, i32) {
    %c0_i32 = arith.constant 0 : i32
    %c0_i32_0 = arith.constant 0 : i32
    return %arg0, %c0_i32 : i32, i32
  }
  func.func @transform_1(%arg0: i32) -> (i32, i32) {
    %c0_i32 = arith.constant 0 : i32
    %c0_i32_0 = arith.constant 0 : i32
    %c0_i32_1 = arith.constant 0 : i32
    return %c0_i32, %c0_i32_0 : i32, i32
  }
  func.func @transform_2(%arg0: i32) -> (i32, i32) {
    %c0_i32 = arith.constant 0 : i32
    %c0_i32_0 = arith.constant 0 : i32
    %c0_i32_1 = arith.constant 0 : i32
    return %c0_i32, %c0_i32_0 : i32, i32
  }
  func.func @transform_3(%arg0: i32) -> (i32, i32) {
    %c0_i32 = arith.constant 0 : i32
    %c0_i32_0 = arith.constant 0 : i32
    return %arg0, %c0_i32 : i32, i32
  }
}

</mosaic_0001>

<llo_original>
// kernel: tpu_custom_call.1
$region0: #{tpu_custom_call.1}
  #allocation0 [shape = 'u32[]', space=smem, size = 0x4, offset = 0x4, fixed_abs, tag = 'smem constant byte address 0x4 - core index']
  #allocation1 [shape = 'u32[144,128]{1,0:T(1,128)}', space=vmem, size = 0x12000, scoped, tag = 'internal scratch']
  %s0 = inlined_call_operand.hbm [shape: f32[256,128], index: 0, kind: input, shape index: {}]
  %s1 = inlined_call_operand.hbm [shape: bf16[128,384], index: 1, kind: input, shape index: {}]
  %s2 = inlined_call_operand.vmem [shape: f32[1,384], index: 2, kind: input, shape index: {}]
  %s3 = inlined_call_operand.hbm [shape: bf16[256,384], index: 3, kind: output, shape index: {}]
  %s4 = sld [smem:[#allocation0]]
  $region30: #{tpu_custom_call.1} parent=0
    _
  %s6 = ssub.s32 1, %s4
  %s7 = scalar_select 0, %s6, %s4
  $region1: #{tpu_custom_call.1} parent=0
    #allocation2 [shape = 'u8[131072]{0}', space=vmem, size = 0x20000, scoped, tag = 'input window, operand 0, single buffered']
    #allocation3 [shape = 's32[1]{0}', space=sflag, size = 0x4, scoped, tag = 'scoped memory for tpu_custom_call.1']
    #allocation4 [shape = 's32[1]{0}', space=sflag, size = 0x4, scoped, tag = 'scoped memory for tpu_custom_call.1']
    #allocation5 [shape = 'u8[98304]{0}', space=vmem, size = 0x18000, scoped, tag = 'input window, operand 1, single buffered']
    #allocation6 [shape = 's32[1]{0}', space=sflag, size = 0x4, scoped, tag = 'scoped memory for tpu_custom_call.1']
    #allocation7 [shape = 'u8[196608]{0}', space=vmem, size = 0x30000, scoped, tag = 'output window, operand 0, single buffered']
    %8 = vsyncpa [#allocation3], 0
    %9 = vsyncpa [#allocation6], 0
    %10 = vsyncpa [#allocation4], 0
    // Predicated region
    $region2: #{tpu_custom_call.1} parent=1 // pred_check
      _
    $region3: #{tpu_custom_call.1} parent=1 // pred_check_branch
      %12 = sbr.rel (0) target = $region5
    $region4: #{tpu_custom_call.1} parent=1 // pred_region
      %s14 = ssub.s32 4096, 4096
      %15 = vsyncadd [#allocation3], %s14
      %s16 = sshll.u32 [#allocation2], 4
      %s17 = int_to_ptr.vmem [resolvable:$true] %s16
      %22 = dma.hbm_to_vmem [thread:$0]  %s0, 4096, %s17, [#allocation3], 128, 128, 8
    $region5: #{tpu_custom_call.1} parent=1 // pred_fallthru
      _
    // Predicated region
    $region6: #{tpu_custom_call.1} parent=1 // pred_check
      _
    $region7: #{tpu_custom_call.1} parent=1 // pred_check_branch
      %24 = sbr.rel (0) target = $region9
    $region8: #{tpu_custom_call.1} parent=1 // pred_region
      %s26 = ssub.s32 3072, 3072
      %27 = vsyncadd [#allocation6], %s26
      %s28 = sshll.u32 [#allocation5], 4
      %s29 = int_to_ptr.vmem [resolvable:$true] %s28
      %34 = dma.hbm_to_vmem [thread:$0]  %s1, 3072, %s29, [#allocation6], 192, 192, 12
    $region9: #{tpu_custom_call.1} parent=1 // pred_fallthru
      _
    // Predicated region
    $region10: #{tpu_custom_call.1} parent=1 // pred_check
      _
    $region11: #{tpu_custom_call.1} parent=1 // pred_check_branch
      %36 = sbr.rel (0) target = $region13
    $region12: #{tpu_custom_call.1} parent=1 // pred_region
      _
    $region13: #{tpu_custom_call.1} parent=1 // pred_fallthru
      _
    // Predicated region
    $region14: #{tpu_custom_call.1} parent=1 // pred_check
      _
    $region15: #{tpu_custom_call.1} parent=1 // pred_check_branch
      %38 = sbr.rel (0) target = $region17
    $region16: #{tpu_custom_call.1} parent=1 // pred_region
      %39 = dma.done [#allocation3], 4096
    $region17: #{tpu_custom_call.1} parent=1 // pred_fallthru
      _
    // Predicated region
    $region18: #{tpu_custom_call.1} parent=1 // pred_check
      _
    $region19: #{tpu_custom_call.1} parent=1 // pred_check_branch
      %41 = sbr.rel (0) target = $region21
    $region20: #{tpu_custom_call.1} parent=1 // pred_region
      %42 = dma.done [#allocation6], 3072
    $region21: #{tpu_custom_call.1} parent=1 // pred_fallthru
      _
    %v44 = vld [vmem:[#allocation2] sm:$0xff]
    %v45 = vld [vmem:[#allocation2 + $0x8] sm:$0xff]
    %v46 = vld [vmem:[#allocation2 + $0x10] sm:$0xff]
    %v47 = vld [vmem:[#allocation2 + $0x18] sm:$0xff]
    %v48 = vld [vmem:[#allocation2 + $0x20] sm:$0xff]
    %v49 = vld [vmem:[#allocation2 + $0x28] sm:$0xff]
    %v50 = vld [vmem:[#allocation2 + $0x30] sm:$0xff]
    %v51 = vld [vmem:[#allocation2 + $0x38] sm:$0xff]
    %v52 = vld [vmem:[#allocation2 + $0x40] sm:$0xff]
    %v53 = vld [vmem:[#allocation2 + $0x48] sm:$0xff]
    %v54 = vld [vmem:[#allocation2 + $0x50] sm:$0xff]
    %v55 = vld [vmem:[#allocation2 + $0x58] sm:$0xff]
    %v56 = vld [vmem:[#allocation2 + $0x60] sm:$0xff]
    %v57 = vld [vmem:[#allocation2 + $0x68] sm:$0xff]
    %v58 = vld [vmem:[#allocation2 + $0x70] sm:$0xff]
    %v59 = vld [vmem:[#allocation2 + $0x78] sm:$0xff]
    %v60 = vld [vmem:[#allocation2 + $0x80] sm:$0xff]
    %v61 = vld [vmem:[#allocation2 + $0x88] sm:$0xff]
    %v62 = vld [vmem:[#allocation2 + $0x90] sm:$0xff]
    %v63 = vld [vmem:[#allocation2 + $0x98] sm:$0xff]
    %v64 = vld [vmem:[#allocation2 + $0xa0] sm:$0xff]
    %v65 = vld [vmem:[#allocation2 + $0xa8] sm:$0xff]
    %v66 = vld [vmem:[#allocation2 + $0xb0] sm:$0xff]
    %v67 = vld [vmem:[#allocation2 + $0xb8] sm:$0xff]
    %v68 = vld [vmem:[#allocation2 + $0xc0] sm:$0xff]
    %v69 = vld [vmem:[#allocation2 + $0xc8] sm:$0xff]
    %v70 = vld [vmem:[#allocation2 + $0xd0] sm:$0xff]
    %v71 = vld [vmem:[#allocation2 + $0xd8] sm:$0xff]
    %v72 = vld [vmem:[#allocation2 + $0xe0] sm:$0xff]
    %v73 = vld [vmem:[#allocation2 + $0xe8] sm:$0xff]
    %v74 = vld [vmem:[#allocation2 + $0xf0] sm:$0xff]
    %v75 = vld [vmem:[#allocation2 + $0xf8] sm:$0xff]
    %v76 = vpack.c.bf16 %v45, %v44
    %v77 = vpack.c.bf16 %v47, %v46
    %v78 = vpack.c.bf16 %v49, %v48
    %v79 = vpack.c.bf16 %v51, %v50
    %v80 = vpack.c.bf16 %v53, %v52
    %v81 = vpack.c.bf16 %v55, %v54
    %v82 = vpack.c.bf16 %v57, %v56
    %v83 = vpack.c.bf16 %v59, %v58
    %v84 = vpack.c.bf16 %v61, %v60
    %v85 = vpack.c.bf16 %v63, %v62
    %v86 = vpack.c.bf16 %v65, %v64
    %v87 = vpack.c.bf16 %v67, %v66
    %v88 = vpack.c.bf16 %v69, %v68
    %v89 = vpack.c.bf16 %v71, %v70
    %v90 = vpack.c.bf16 %v73, %v72
    %v91 = vpack.c.bf16 %v75, %v74
    %v92 = vld [vmem:[#allocation5] sm:$0xff]
    %v93 = vld [vmem:[#allocation5 + $0x8] sm:$0xf]
    %v94 = vld [vmem:[#allocation5 + $0xc] sm:$0xff]
    %v95 = vld [vmem:[#allocation5 + $0x14] sm:$0xf]
    %v96 = vld [vmem:[#allocation5 + $0x18] sm:$0xff]
    %v97 = vld [vmem:[#allocation5 + $0x20] sm:$0xf]
    %v98 = vld [vmem:[#allocation5 + $0x24] sm:$0xff]
    %v99 = vld [vmem:[#allocation5 + $0x2c] sm:$0xf]
    %v100 = vld [vmem:[#allocation5 + $0x30] sm:$0xff]
    %v101 = vld [vmem:[#allocation5 + $0x38] sm:$0xf]
    %v102 = vld [vmem:[#allocation5 + $0x3c] sm:$0xff]
    %v103 = vld [vmem:[#allocation5 + $0x44] sm:$0xf]
    %v104 = vld [vmem:[#allocation5 + $0x48] sm:$0xff]
    %v105 = vld [vmem:[#allocation5 + $0x50] sm:$0xf]
    %v106 = vld [vmem:[#allocation5 + $0x54] sm:$0xff]
    %v107 = vld [vmem:[#allocation5 + $0x5c] sm:$0xf]
    %v108 = vld [vmem:[#allocation5 + $0x60] sm:$0xff]
    %v109 = vld [vmem:[#allocation5 + $0x68] sm:$0xf]
    %v110 = vld [vmem:[#allocation5 + $0x6c] sm:$0xff]
    %v111 = vld [vmem:[#allocation5 + $0x74] sm:$0xf]
    %v112 = vld [vmem:[#allocation5 + $0x78] sm:$0xff]
    %v113 = vld [vmem:[#allocation5 + $0x80] sm:$0xf]
    %v114 = vld [vmem:[#allocation5 + $0x84] sm:$0xff]
    %v115 = vld [vmem:[#allocation5 + $0x8c] sm:$0xf]
    %v116 = vld [vmem:[#allocation5 + $0x90] sm:$0xff]
    %v117 = vld [vmem:[#allocation5 + $0x98] sm:$0xf]
    %v118 = vld [vmem:[#allocation5 + $0x9c] sm:$0xff]
    %v119 = vld [vmem:[#allocation5 + $0xa4] sm:$0xf]
    %v120 = vld [vmem:[#allocation5 + $0xa8] sm:$0xff]
    %v121 = vld [vmem:[#allocation5 + $0xb0] sm:$0xf]
    %v122 = vld [vmem:[#allocation5 + $0xb4] sm:$0xff]
    %v123 = vld [vmem:[#allocation5 + $0xbc] sm:$0xf]
    %v124 = vld [vmem:[%s2] sm:$0x7]
    %v126 = vlaneseq
    %v127 = vshrl.u32 %v126, 7
    %v128 = vsub.s32 0, %v127
    %v129 = vrot.slane %v124, %v128
    %v130 = vlaneseq
    %v131 = vshrl.u32 %v130, 7
    %v132 = vsub.s32 1, %v131
    %v133 = vrot.slane %v124, %v132
    %v134 = vlaneseq
    %v135 = vshrl.u32 %v134, 7
    %v136 = vsub.s32 2, %v135
    %v137 = vrot.slane %v124, %v136
    %v173 = vunpack.c.l.b16 %v92
    %v174 = vunpack.c.h.b16 %v92
    %v175 = vunpack.c.l.b16 %v93
    %v176 = vunpack.c.l.b16 %v94
    %v177 = vunpack.c.h.b16 %v94
    %v178 = vunpack.c.l.b16 %v95
    %v179 = vunpack.c.l.b16 %v96
    %v180 = vunpack.c.h.b16 %v96
    %v181 = vunpack.c.l.b16 %v97
    %v182 = vunpack.c.l.b16 %v98
    %v183 = vunpack.c.h.b16 %v98
    %v184 = vunpack.c.l.b16 %v99
    %v185 = vunpack.c.l.b16 %v100
    %v186 = vunpack.c.h.b16 %v100
    %v187 = vunpack.c.l.b16 %v101
    %v188 = vunpack.c.l.b16 %v102
    %v189 = vunpack.c.h.b16 %v102
    %v190 = vunpack.c.l.b16 %v103
    %v191 = vunpack.c.l.b16 %v104
    %v192 = vunpack.c.h.b16 %v104
    %v193 = vunpack.c.l.b16 %v105
    %v194 = vunpack.c.l.b16 %v106
    %v195 = vunpack.c.h.b16 %v106
    %v196 = vunpack.c.l.b16 %v107
    %v197 = vunpack.c.l.b16 %v108
    %v198 = vunpack.c.h.b16 %v108
    %v199 = vunpack.c.l.b16 %v109
    %v200 = vunpack.c.l.b16 %v110
    %v201 = vunpack.c.h.b16 %v110
    %v202 = vunpack.c.l.b16 %v111
    %v203 = vunpack.c.l.b16 %v112
    %v204 = vunpack.c.h.b16 %v112
    %v205 = vunpack.c.l.b16 %v113
    %v206 = vunpack.c.l.b16 %v114
    %v207 = vunpack.c.h.b16 %v114
    %v208 = vunpack.c.l.b16 %v115
    %v209 = vunpack.c.l.b16 %v116
    %v210 = vunpack.c.h.b16 %v116
    %v211 = vunpack.c.l.b16 %v117
    %v212 = vunpack.c.l.b16 %v118
    %v213 = vunpack.c.h.b16 %v118
    %v214 = vunpack.c.l.b16 %v119
    %v215 = vunpack.c.l.b16 %v120
    %v216 = vunpack.c.h.b16 %v120
    %v217 = vunpack.c.l.b16 %v121
    %v218 = vunpack.c.l.b16 %v122
    %v219 = vunpack.c.h.b16 %v122
    %v220 = vunpack.c.l.b16 %v123
    %v221 = vpack.c.b16 %v176, %v173
    %v222 = vpack.c.b16 %v177, %v174
    %v223 = vpack.c.b16 %v178, %v175
    %v224 = vpack.c.b16 %v182, %v179
    %v225 = vpack.c.b16 %v183, %v180
    %v226 = vpack.c.b16 %v184, %v181
    %v227 = vpack.c.b16 %v188, %v185
    %v228 = vpack.c.b16 %v189, %v186
    %v229 = vpack.c.b16 %v190, %v187
    %v230 = vpack.c.b16 %v194, %v191
    %v231 = vpack.c.b16 %v195, %v192
    %v232 = vpack.c.b16 %v196, %v193
    %v233 = vpack.c.b16 %v200, %v197
    %v234 = vpack.c.b16 %v201, %v198
    %v235 = vpack.c.b16 %v202, %v199
    %v236 = vpack.c.b16 %v206, %v203
    %v237 = vpack.c.b16 %v207, %v204
    %v238 = vpack.c.b16 %v208, %v205
    %v239 = vpack.c.b16 %v212, %v209
    %v240 = vpack.c.b16 %v213, %v210
    %v241 = vpack.c.b16 %v214, %v211
    %v242 = vpack.c.b16 %v218, %v215
    %v243 = vpack.c.b16 %v219, %v216
    %v244 = vpack.c.b16 %v220, %v217
    %269 = vmatprep.subr.bf16.mxu0 %v243
    %270 = vmatpush1.bf16.msra.mxu0 %v242
    %271 = vmatprep.subr.bf16.mxu0 %v240
    %272 = vmatpush1.bf16.msra.mxu0 %v239
    %273 = vmatprep.subr.bf16.mxu0 %v237
    %274 = vmatpush1.bf16.msra.mxu0 %v236
    %275 = vmatprep.subr.bf16.mxu0 %v234
    %276 = vmatpush1.bf16.msra.mxu0 %v233
    %277 = vmatprep.subr.bf16.mxu0 %v231
    %278 = vmatpush1.bf16.msra.mxu0 %v230
    %279 = vmatprep.subr.bf16.mxu0 %v228
    %280 = vmatpush1.bf16.msra.mxu0 %v227
    %281 = vmatprep.subr.bf16.mxu0 %v225
    %282 = vmatpush1.bf16.msra.mxu0 %v224
    %283 = vmatprep.subr.bf16.mxu0 %v222
    %284 = vmatpush1.bf16.msra.mxu0 %v221
    %285 = vmatprep.subr.bf16.mxu0 0
    %286 = vmatpush2.bf16.msra.mxu0 0
    %287 = vmatprep.subr.bf16.mxu0 0
    %288 = vmatpush2.bf16.msra.mxu0 0
    %289 = vmatprep.subr.bf16.mxu0 0
    %290 = vmatpush2.bf16.msra.mxu0 0
    %291 = vmatprep.subr.bf16.mxu0 0
    %292 = vmatpush2.bf16.msra.mxu0 0
    %293 = vmatprep.subr.bf16.mxu0 0
    %294 = vmatpush2.bf16.msra.mxu0 0
    %295 = vmatprep.subr.bf16.mxu0 0
    %296 = vmatpush2.bf16.msra.mxu0 0
    %297 = vmatprep.subr.bf16.mxu0 0
    %298 = vmatpush2.bf16.msra.mxu0 0
    %299 = vmatprep.subr.bf16.mxu0 0
    %300 = vmatpush2.bf16.msra.mxu0 0
    %301 = vmatprep.mubr.bf16.mxu0 0
    %302 = vmatmul.mubr.bf16.gmra.mxu0 %v76
    %v303 = vpop.f32.mrf.mxu0
    %v304 = vadd.f32 %v129, %v303
    %v305 = vpop.f32.mrf.mxu0
    %v306 = vadd.f32 %v133, %v305
    %v307 = vpop.f32.mrf.mxu0
    %v308 = vadd.f32 %v129, %v307
    %v309 = vpop.f32.mrf.mxu0
    %v310 = vadd.f32 %v133, %v309
    %311 = vmatprep.mubr.bf16.mxu0 0
    %312 = vmatmul.mubr.bf16.gmra.mxu0 %v77
    %v313 = vpop.f32.mrf.mxu0
    %v314 = vadd.f32 %v129, %v313
    %v315 = vpop.f32.mrf.mxu0
    %v316 = vadd.f32 %v133, %v315
    %v317 = vpop.f32.mrf.mxu0
    %v318 = vadd.f32 %v129, %v317
    %v319 = vpop.f32.mrf.mxu0
    %v320 = vadd.f32 %v133, %v319
    %321 = vmatprep.mubr.bf16.mxu0 0
    %322 = vmatmul.mubr.bf16.gmra.mxu0 %v78
    %v323 = vpop.f32.mrf.mxu0
    %v324 = vadd.f32 %v129, %v323
    %v325 = vpop.f32.mrf.mxu0
    %v326 = vadd.f32 %v133, %v325
    %v327 = vpop.f32.mrf.mxu0
    %v328 = vadd.f32 %v129, %v327
    %v329 = vpop.f32.mrf.mxu0
    %v330 = vadd.f32 %v133, %v329
    %331 = vmatprep.mubr.bf16.mxu0 0
    %332 = vmatmul.mubr.bf16.gmra.mxu0 %v79
    %v333 = vpop.f32.mrf.mxu0
    %v334 = vadd.f32 %v129, %v333
    %v335 = vpop.f32.mrf.mxu0
    %v336 = vadd.f32 %v133, %v335
    %v337 = vpop.f32.mrf.mxu0
    %v338 = vadd.f32 %v129, %v337
    %v339 = vpop.f32.mrf.mxu0
    %v340 = vadd.f32 %v133, %v339
    %341 = vmatprep.mubr.bf16.mxu0 0
    %342 = vmatmul.mubr.bf16.gmra.mxu0 %v80
    %v343 = vpop.f32.mrf.mxu0
    %v344 = vadd.f32 %v129, %v343
    %v345 = vpop.f32.mrf.mxu0
    %v346 = vadd.f32 %v133, %v345
    %v347 = vpop.f32.mrf.mxu0
    %v348 = vadd.f32 %v129, %v347
    %v349 = vpop.f32.mrf.mxu0
    %v350 = vadd.f32 %v133, %v349
    %351 = vmatprep.mubr.bf16.mxu0 0
    %352 = vmatmul.mubr.bf16.gmra.mxu0 %v81
    %v353 = vpop.f32.mrf.mxu0
    %v354 = vadd.f32 %v129, %v353
    %v355 = vpop.f32.mrf.mxu0
    %v356 = vadd.f32 %v133, %v355
    %v357 = vpop.f32.mrf.mxu0
    %v358 = vadd.f32 %v129, %v357
    %v359 = vpop.f32.mrf.mxu0
    %v360 = vadd.f32 %v133, %v359
    %361 = vmatprep.mubr.bf16.mxu0 0
    %362 = vmatmul.mubr.bf16.gmra.mxu0 %v82
    %v363 = vpop.f32.mrf.mxu0
    %v364 = vadd.f32 %v129, %v363
    %v365 = vpop.f32.mrf.mxu0
    %v366 = vadd.f32 %v133, %v365
    %v367 = vpop.f32.mrf.mxu0
    %v368 = vadd.f32 %v129, %v367
    %v369 = vpop.f32.mrf.mxu0
    %v370 = vadd.f32 %v133, %v369
    %371 = vmatprep.mubr.bf16.mxu0 0
    %372 = vmatmul.mubr.bf16.gmra.mxu0 %v83
    %v373 = vpop.f32.mrf.mxu0
    %v374 = vadd.f32 %v129, %v373
    %v375 = vpop.f32.mrf.mxu0
    %v376 = vadd.f32 %v133, %v375
    %v377 = vpop.f32.mrf.mxu0
    %v378 = vadd.f32 %v129, %v377
    %v379 = vpop.f32.mrf.mxu0
    %v380 = vadd.f32 %v133, %v379
    %381 = vmatprep.mubr.bf16.mxu0 0
    %382 = vmatmul.mubr.bf16.gmra.mxu0 %v84
    %v383 = vpop.f32.mrf.mxu0
    %v384 = vadd.f32 %v129, %v383
    %v385 = vpop.f32.mrf.mxu0
    %v386 = vadd.f32 %v133, %v385
    %v387 = vpop.f32.mrf.mxu0
    %v388 = vadd.f32 %v129, %v387
    %v389 = vpop.f32.mrf.mxu0
    %v390 = vadd.f32 %v133, %v389
    %391 = vmatprep.mubr.bf16.mxu0 0
    %392 = vmatmul.mubr.bf16.gmra.mxu0 %v85
    %v393 = vpop.f32.mrf.mxu0
    %v394 = vadd.f32 %v129, %v393
    %v395 = vpop.f32.mrf.mxu0
    %v396 = vadd.f32 %v133, %v395
    %v397 = vpop.f32.mrf.mxu0
    %v398 = vadd.f32 %v129, %v397
    %v399 = vpop.f32.mrf.mxu0
    %v400 = vadd.f32 %v133, %v399
    %401 = vmatprep.mubr.bf16.mxu0 0
    %402 = vmatmul.mubr.bf16.gmra.mxu0 %v86
    %v403 = vpop.f32.mrf.mxu0
    %v404 = vadd.f32 %v129, %v403
    %v405 = vpop.f32.mrf.mxu0
    %v406 = vadd.f32 %v133, %v405
    %v407 = vpop.f32.mrf.mxu0
    %v408 = vadd.f32 %v129, %v407
    %v409 = vpop.f32.mrf.mxu0
    %v410 = vadd.f32 %v133, %v409
    %411 = vmatprep.mubr.bf16.mxu0 0
    %412 = vmatmul.mubr.bf16.gmra.mxu0 %v87
    %v413 = vpop.f32.mrf.mxu0
    %v414 = vadd.f32 %v129, %v413
    %v415 = vpop.f32.mrf.mxu0
    %v416 = vadd.f32 %v133, %v415
    %v417 = vpop.f32.mrf.mxu0
    %v418 = vadd.f32 %v129, %v417
    %v419 = vpop.f32.mrf.mxu0
    %v420 = vadd.f32 %v133, %v419
    %421 = vmatprep.mubr.bf16.mxu0 0
    %422 = vmatmul.mubr.bf16.gmra.mxu0 %v88
    %v423 = vpop.f32.mrf.mxu0
    %v424 = vadd.f32 %v129, %v423
    %v425 = vpop.f32.mrf.mxu0
    %v426 = vadd.f32 %v133, %v425
    %v427 = vpop.f32.mrf.mxu0
    %v428 = vadd.f32 %v129, %v427
    %v429 = vpop.f32.mrf.mxu0
    %v430 = vadd.f32 %v133, %v429
    %431 = vmatprep.mubr.bf16.mxu0 0
    %432 = vmatmul.mubr.bf16.gmra.mxu0 %v89
    %v433 = vpop.f32.mrf.mxu0
    %v434 = vadd.f32 %v129, %v433
    %v435 = vpop.f32.mrf.mxu0
    %v436 = vadd.f32 %v133, %v435
    %v437 = vpop.f32.mrf.mxu0
    %v438 = vadd.f32 %v129, %v437
    %v439 = vpop.f32.mrf.mxu0
    %v440 = vadd.f32 %v133, %v439
    %441 = vmatprep.mubr.bf16.mxu0 0
    %442 = vmatmul.mubr.bf16.gmra.mxu0 %v90
    %v443 = vpop.f32.mrf.mxu0
    %v444 = vadd.f32 %v129, %v443
    %v445 = vpop.f32.mrf.mxu0
    %v446 = vadd.f32 %v133, %v445
    %v447 = vpop.f32.mrf.mxu0
    %v448 = vadd.f32 %v129, %v447
    %v449 = vpop.f32.mrf.mxu0
    %v450 = vadd.f32 %v133, %v449
    %451 = vmatprep.mubr.bf16.mxu0 0
    %452 = vmatmul.mubr.bf16.gmra.mxu0 %v91
    %v453 = vpop.f32.mrf.mxu0
    %v454 = vadd.f32 %v129, %v453
    %v455 = vpop.f32.mrf.mxu0
    %v456 = vadd.f32 %v133, %v455
    %v457 = vpop.f32.mrf.mxu0
    %v458 = vadd.f32 %v129, %v457
    %v459 = vpop.f32.mrf.mxu0
    %v460 = vadd.f32 %v133, %v459
    %461 = vdwg.mxu0
    %462 = vmatprep.subr.bf16.mxu0 0
    %463 = vmatpush1.bf16.msra.mxu0 %v244
    %464 = vmatprep.subr.bf16.mxu0 0
    %465 = vmatpush1.bf16.msra.mxu0 %v241
    %466 = vmatprep.subr.bf16.mxu0 0
    %467 = vmatpush1.bf16.msra.mxu0 %v238
    %468 = vmatprep.subr.bf16.mxu0 0
    %469 = vmatpush1.bf16.msra.mxu0 %v235
    %470 = vmatprep.subr.bf16.mxu0 0
    %471 = vmatpush1.bf16.msra.mxu0 %v232
    %472 = vmatprep.subr.bf16.mxu0 0
    %473 = vmatpush1.bf16.msra.mxu0 %v229
    %474 = vmatprep.subr.bf16.mxu0 0
    %475 = vmatpush1.bf16.msra.mxu0 %v226
    %476 = vmatprep.subr.bf16.mxu0 0
    %477 = vmatpush1.bf16.msra.mxu0 %v223
    %478 = vmatprep.subr.bf16.mxu0 0
    %479 = vmatpush2.bf16.msra.mxu0 0
    %480 = vmatprep.subr.bf16.mxu0 0
    %481 = vmatpush2.bf16.msra.mxu0 0
    %482 = vmatprep.subr.bf16.mxu0 0
    %483 = vmatpush2.bf16.msra.mxu0 0
    %484 = vmatprep.subr.bf16.mxu0 0
    %485 = vmatpush2.bf16.msra.mxu0 0
    %486 = vmatprep.subr.bf16.mxu0 0
    %487 = vmatpush2.bf16.msra.mxu0 0
    %488 = vmatprep.subr.bf16.mxu0 0
    %489 = vmatpush2.bf16.msra.mxu0 0
    %490 = vmatprep.subr.bf16.mxu0 0
    %491 = vmatpush2.bf16.msra.mxu0 0
    %492 = vmatprep.subr.bf16.mxu0 0
    %493 = vmatpush2.bf16.msra.mxu0 0
    %494 = vmatprep.mubr.bf16.mxu0 0
    %495 = vmatmul.mubr.bf16.gmra.mxu0 %v76
    %v496 = vpop.f32.mrf.mxu0
    %v497 = vadd.f32 %v137, %v496
    %v498 = vpop.f32.mrf.mxu0
    %v499 = vpop.f32.mrf.mxu0
    %v500 = vadd.f32 %v137, %v499
    %v501 = vpop.f32.mrf.mxu0
    %502 = vmatprep.mubr.bf16.mxu0 0
    %503 = vmatmul.mubr.bf16.gmra.mxu0 %v77
    %v504 = vpop.f32.mrf.mxu0
    %v505 = vadd.f32 %v137, %v504
    %v506 = vpop.f32.mrf.mxu0
    %v507 = vpop.f32.mrf.mxu0
    %v508 = vadd.f32 %v137, %v507
    %v509 = vpop.f32.mrf.mxu0
    %510 = vmatprep.mubr.bf16.mxu0 0
    %511 = vmatmul.mubr.bf16.gmra.mxu0 %v78
    %v512 = vpop.f32.mrf.mxu0
    %v513 = vadd.f32 %v137, %v512
    %v514 = vpop.f32.mrf.mxu0
    %v515 = vpop.f32.mrf.mxu0
    %v516 = vadd.f32 %v137, %v515
    %v517 = vpop.f32.mrf.mxu0
    %518 = vmatprep.mubr.bf16.mxu0 0
    %519 = vmatmul.mubr.bf16.gmra.mxu0 %v79
    %v520 = vpop.f32.mrf.mxu0
    %v521 = vadd.f32 %v137, %v520
    %v522 = vpop.f32.mrf.mxu0
    %v523 = vpop.f32.mrf.mxu0
    %v524 = vadd.f32 %v137, %v523
    %v525 = vpop.f32.mrf.mxu0
    %526 = vmatprep.mubr.bf16.mxu0 0
    %527 = vmatmul.mubr.bf16.gmra.mxu0 %v80
    %v528 = vpop.f32.mrf.mxu0
    %v529 = vadd.f32 %v137, %v528
    %v530 = vpop.f32.mrf.mxu0
    %v531 = vpop.f32.mrf.mxu0
    %v532 = vadd.f32 %v137, %v531
    %v533 = vpop.f32.mrf.mxu0
    %534 = vmatprep.mubr.bf16.mxu0 0
    %535 = vmatmul.mubr.bf16.gmra.mxu0 %v81
    %v536 = vpop.f32.mrf.mxu0
    %v537 = vadd.f32 %v137, %v536
    %v538 = vpop.f32.mrf.mxu0
    %v539 = vpop.f32.mrf.mxu0
    %v540 = vadd.f32 %v137, %v539
    %v541 = vpop.f32.mrf.mxu0
    %542 = vmatprep.mubr.bf16.mxu0 0
    %543 = vmatmul.mubr.bf16.gmra.mxu0 %v82
    %v544 = vpop.f32.mrf.mxu0
    %v545 = vadd.f32 %v137, %v544
    %v546 = vpop.f32.mrf.mxu0
    %v547 = vpop.f32.mrf.mxu0
    %v548 = vadd.f32 %v137, %v547
    %v549 = vpop.f32.mrf.mxu0
    %550 = vmatprep.mubr.bf16.mxu0 0
    %551 = vmatmul.mubr.bf16.gmra.mxu0 %v83
    %v552 = vpop.f32.mrf.mxu0
    %v553 = vadd.f32 %v137, %v552
    %v554 = vpop.f32.mrf.mxu0
    %v555 = vpop.f32.mrf.mxu0
    %v556 = vadd.f32 %v137, %v555
    %v557 = vpop.f32.mrf.mxu0
    %558 = vmatprep.mubr.bf16.mxu0 0
    %559 = vmatmul.mubr.bf16.gmra.mxu0 %v84
    %v560 = vpop.f32.mrf.mxu0
    %v561 = vadd.f32 %v137, %v560
    %v562 = vpop.f32.mrf.mxu0
    %v563 = vpop.f32.mrf.mxu0
    %v564 = vadd.f32 %v137, %v563
    %v565 = vpop.f32.mrf.mxu0
    %566 = vmatprep.mubr.bf16.mxu0 0
    %567 = vmatmul.mubr.bf16.gmra.mxu0 %v85
    %v568 = vpop.f32.mrf.mxu0
    %v569 = vadd.f32 %v137, %v568
    %v570 = vpop.f32.mrf.mxu0
    %v571 = vpop.f32.mrf.mxu0
    %v572 = vadd.f32 %v137, %v571
    %v573 = vpop.f32.mrf.mxu0
    %574 = vmatprep.mubr.bf16.mxu0 0
    %575 = vmatmul.mubr.bf16.gmra.mxu0 %v86
    %v576 = vpop.f32.mrf.mxu0
    %v577 = vadd.f32 %v137, %v576
    %v578 = vpop.f32.mrf.mxu0
    %v579 = vpop.f32.mrf.mxu0
    %v580 = vadd.f32 %v137, %v579
    %v581 = vpop.f32.mrf.mxu0
    %582 = vmatprep.mubr.bf16.mxu0 0
    %583 = vmatmul.mubr.bf16.gmra.mxu0 %v87
    %v584 = vpop.f32.mrf.mxu0
    %v585 = vadd.f32 %v137, %v584
    %v586 = vpop.f32.mrf.mxu0
    %v587 = vpop.f32.mrf.mxu0
    %v588 = vadd.f32 %v137, %v587
    %v589 = vpop.f32.mrf.mxu0
    %590 = vmatprep.mubr.bf16.mxu0 0
    %591 = vmatmul.mubr.bf16.gmra.mxu0 %v88
    %v592 = vpop.f32.mrf.mxu0
    %v593 = vadd.f32 %v137, %v592
    %v594 = vpop.f32.mrf.mxu0
    %v595 = vpop.f32.mrf.mxu0
    %v596 = vadd.f32 %v137, %v595
    %v597 = vpop.f32.mrf.mxu0
    %598 = vmatprep.mubr.bf16.mxu0 0
    %599 = vmatmul.mubr.bf16.gmra.mxu0 %v89
    %v600 = vpop.f32.mrf.mxu0
    %v601 = vadd.f32 %v137, %v600
    %v602 = vpop.f32.mrf.mxu0
    %v603 = vpop.f32.mrf.mxu0
    %v604 = vadd.f32 %v137, %v603
    %v605 = vpop.f32.mrf.mxu0
    %606 = vmatprep.mubr.bf16.mxu0 0
    %607 = vmatmul.mubr.bf16.gmra.mxu0 %v90
    %v608 = vpop.f32.mrf.mxu0
    %v609 = vadd.f32 %v137, %v608
    %v610 = vpop.f32.mrf.mxu0
    %v611 = vpop.f32.mrf.mxu0
    %v612 = vadd.f32 %v137, %v611
    %v613 = vpop.f32.mrf.mxu0
    %614 = vmatprep.mubr.bf16.mxu0 0
    %615 = vmatmul.mubr.bf16.gmra.mxu0 %v91
    %v616 = vpop.f32.mrf.mxu0
    %v617 = vadd.f32 %v137, %v616
    %v618 = vpop.f32.mrf.mxu0
    %v619 = vpop.f32.mrf.mxu0
    %v620 = vadd.f32 %v137, %v619
    %v621 = vpop.f32.mrf.mxu0
    %622 = vdwg.mxu0
    %v623 = vpack.c.bf16 %v308, %v304
    %v624 = vpack.c.bf16 %v310, %v306
    %v625 = vpack.c.bf16 %v500, %v497
    %v626 = vpack.c.bf16 %v318, %v314
    %v627 = vpack.c.bf16 %v320, %v316
    %v628 = vpack.c.bf16 %v508, %v505
    %v629 = vpack.c.bf16 %v328, %v324
    %v630 = vpack.c.bf16 %v330, %v326
    %v631 = vpack.c.bf16 %v516, %v513
    %v632 = vpack.c.bf16 %v338, %v334
    %v633 = vpack.c.bf16 %v340, %v336
    %v634 = vpack.c.bf16 %v524, %v521
    %v635 = vpack.c.bf16 %v348, %v344
    %v636 = vpack.c.bf16 %v350, %v346
    %v637 = vpack.c.bf16 %v532, %v529
    %v638 = vpack.c.bf16 %v358, %v354
    %v639 = vpack.c.bf16 %v360, %v356
    %v640 = vpack.c.bf16 %v540, %v537
    %v641 = vpack.c.bf16 %v368, %v364
    %v642 = vpack.c.bf16 %v370, %v366
    %v643 = vpack.c.bf16 %v548, %v545
    %v644 = vpack.c.bf16 %v378, %v374
    %v645 = vpack.c.bf16 %v380, %v376
    %v646 = vpack.c.bf16 %v556, %v553
    %v647 = vpack.c.bf16 %v388, %v384
    %v648 = vpack.c.bf16 %v390, %v386
    %v649 = vpack.c.bf16 %v564, %v561
    %v650 = vpack.c.bf16 %v398, %v394
    %v651 = vpack.c.bf16 %v400, %v396
    %v652 = vpack.c.bf16 %v572, %v569
    %v653 = vpack.c.bf16 %v408, %v404
    %v654 = vpack.c.bf16 %v410, %v406
    %v655 = vpack.c.bf16 %v580, %v577
    %v656 = vpack.c.bf16 %v418, %v414
    %v657 = vpack.c.bf16 %v420, %v416
    %v658 = vpack.c.bf16 %v588, %v585
    %v659 = vpack.c.bf16 %v428, %v424
    %v660 = vpack.c.bf16 %v430, %v426
    %v661 = vpack.c.bf16 %v596, %v593
    %v662 = vpack.c.bf16 %v438, %v434
    %v663 = vpack.c.bf16 %v440, %v436
    %v664 = vpack.c.bf16 %v604, %v601
    %v665 = vpack.c.bf16 %v448, %v444
    %v666 = vpack.c.bf16 %v450, %v446
    %v667 = vpack.c.bf16 %v612, %v609
    %v668 = vpack.c.bf16 %v458, %v454
    %v669 = vpack.c.bf16 %v460, %v456
    %v670 = vpack.c.bf16 %v620, %v617
    %v719 = vunpack.c.l.b16 %v623
    %v720 = vunpack.c.l.b16 %v624
    %v721 = vunpack.c.l.b16 %v625
    %v722 = vunpack.c.h.b16 %v623
    %v723 = vunpack.c.h.b16 %v624
    %v724 = vunpack.c.h.b16 %v625
    %v725 = vunpack.c.l.b16 %v626
    %v726 = vunpack.c.l.b16 %v627
    %v727 = vunpack.c.l.b16 %v628
    %v728 = vunpack.c.h.b16 %v626
    %v729 = vunpack.c.h.b16 %v627
    %v730 = vunpack.c.h.b16 %v628
    %v731 = vunpack.c.l.b16 %v629
    %v732 = vunpack.c.l.b16 %v630
    %v733 = vunpack.c.l.b16 %v631
    %v734 = vunpack.c.h.b16 %v629
    %v735 = vunpack.c.h.b16 %v630
    %v736 = vunpack.c.h.b16 %v631
    %v737 = vunpack.c.l.b16 %v632
    %v738 = vunpack.c.l.b16 %v633
    %v739 = vunpack.c.l.b16 %v634
    %v740 = vunpack.c.h.b16 %v632
    %v741 = vunpack.c.h.b16 %v633
    %v742 = vunpack.c.h.b16 %v634
    %v743 = vunpack.c.l.b16 %v635
    %v744 = vunpack.c.l.b16 %v636
    %v745 = vunpack.c.l.b16 %v637
    %v746 = vunpack.c.h.b16 %v635
    %v747 = vunpack.c.h.b16 %v636
    %v748 = vunpack.c.h.b16 %v637
    %v749 = vunpack.c.l.b16 %v638
    %v750 = vunpack.c.l.b16 %v639
    %v751 = vunpack.c.l.b16 %v640
    %v752 = vunpack.c.h.b16 %v638
    %v753 = vunpack.c.h.b16 %v639
    %v754 = vunpack.c.h.b16 %v640
    %v755 = vunpack.c.l.b16 %v641
    %v756 = vunpack.c.l.b16 %v642
    %v757 = vunpack.c.l.b16 %v643
    %v758 = vunpack.c.h.b16 %v641
    %v759 = vunpack.c.h.b16 %v642
    %v760 = vunpack.c.h.b16 %v643
    %v761 = vunpack.c.l.b16 %v644
    %v762 = vunpack.c.l.b16 %v645
    %v763 = vunpack.c.l.b16 %v646
    %v764 = vunpack.c.h.b16 %v644
    %v765 = vunpack.c.h.b16 %v645
    %v766 = vunpack.c.h.b16 %v646
    %v767 = vunpack.c.l.b16 %v647
    %v768 = vunpack.c.l.b16 %v648
    %v769 = vunpack.c.l.b16 %v649
    %v770 = vunpack.c.h.b16 %v647
    %v771 = vunpack.c.h.b16 %v648
    %v772 = vunpack.c.h.b16 %v649
    %v773 = vunpack.c.l.b16 %v650
    %v774 = vunpack.c.l.b16 %v651
    %v775 = vunpack.c.l.b16 %v652
    %v776 = vunpack.c.h.b16 %v650
    %v777 = vunpack.c.h.b16 %v651
    %v778 = vunpack.c.h.b16 %v652
    %v779 = vunpack.c.l.b16 %v653
    %v780 = vunpack.c.l.b16 %v654
    %v781 = vunpack.c.l.b16 %v655
    %v782 = vunpack.c.h.b16 %v653
    %v783 = vunpack.c.h.b16 %v654
    %v784 = vunpack.c.h.b16 %v655
    %v785 = vunpack.c.l.b16 %v656
    %v786 = vunpack.c.l.b16 %v657
    %v787 = vunpack.c.l.b16 %v658
    %v788 = vunpack.c.h.b16 %v656
    %v789 = vunpack.c.h.b16 %v657
    %v790 = vunpack.c.h.b16 %v658
    %v791 = vunpack.c.l.b16 %v659
    %v792 = vunpack.c.l.b16 %v660
    %v793 = vunpack.c.l.b16 %v661
    %v794 = vunpack.c.h.b16 %v659
    %v795 = vunpack.c.h.b16 %v660
    %v796 = vunpack.c.h.b16 %v661
    %v797 = vunpack.c.l.b16 %v662
    %v798 = vunpack.c.l.b16 %v663
    %v799 = vunpack.c.l.b16 %v664
    %v800 = vunpack.c.h.b16 %v662
    %v801 = vunpack.c.h.b16 %v663
    %v802 = vunpack.c.h.b16 %v664
    %v803 = vunpack.c.l.b16 %v665
    %v804 = vunpack.c.l.b16 %v666
    %v805 = vunpack.c.l.b16 %v667
    %v806 = vunpack.c.h.b16 %v665
    %v807 = vunpack.c.h.b16 %v666
    %v808 = vunpack.c.h.b16 %v667
    %v809 = vunpack.c.l.b16 %v668
    %v810 = vunpack.c.l.b16 %v669
    %v811 = vunpack.c.l.b16 %v670
    %v812 = vunpack.c.h.b16 %v668
    %v813 = vunpack.c.h.b16 %v669
    %v814 = vunpack.c.h.b16 %v670
    %v815 = vpack.c.b16 %v720, %v719
    %v816 = vpack.c.b16 %v721, %v721
    %v817 = vpack.c.b16 %v723, %v722
    %v818 = vpack.c.b16 %v724, %v724
    %v819 = vpack.c.b16 %v726, %v725
    %v820 = vpack.c.b16 %v727, %v727
    %v821 = vpack.c.b16 %v729, %v728
    %v822 = vpack.c.b16 %v730, %v730
    %v823 = vpack.c.b16 %v732, %v731
    %v824 = vpack.c.b16 %v733, %v733
    %v825 = vpack.c.b16 %v735, %v734
    %v826 = vpack.c.b16 %v736, %v736
    %v827 = vpack.c.b16 %v738, %v737
    %v828 = vpack.c.b16 %v739, %v739
    %v829 = vpack.c.b16 %v741, %v740
    %v830 = vpack.c.b16 %v742, %v742
    %v831 = vpack.c.b16 %v744, %v743
    %v832 = vpack.c.b16 %v745, %v745
    %v833 = vpack.c.b16 %v747, %v746
    %v834 = vpack.c.b16 %v748, %v748
    %v835 = vpack.c.b16 %v750, %v749
    %v836 = vpack.c.b16 %v751, %v751
    %v837 = vpack.c.b16 %v753, %v752
    %v838 = vpack.c.b16 %v754, %v754
    %v839 = vpack.c.b16 %v756, %v755
    %v840 = vpack.c.b16 %v757, %v757
    %v841 = vpack.c.b16 %v759, %v758
    %v842 = vpack.c.b16 %v760, %v760
    %v843 = vpack.c.b16 %v762, %v761
    %v844 = vpack.c.b16 %v763, %v763
    %v845 = vpack.c.b16 %v765, %v764
    %v846 = vpack.c.b16 %v766, %v766
    %v847 = vpack.c.b16 %v768, %v767
    %v848 = vpack.c.b16 %v769, %v769
    %v849 = vpack.c.b16 %v771, %v770
    %v850 = vpack.c.b16 %v772, %v772
    %v851 = vpack.c.b16 %v774, %v773
    %v852 = vpack.c.b16 %v775, %v775
    %v853 = vpack.c.b16 %v777, %v776
    %v854 = vpack.c.b16 %v778, %v778
    %v855 = vpack.c.b16 %v780, %v779
    %v856 = vpack.c.b16 %v781, %v781
    %v857 = vpack.c.b16 %v783, %v782
    %v858 = vpack.c.b16 %v784, %v784
    %v859 = vpack.c.b16 %v786, %v785
    %v860 = vpack.c.b16 %v787, %v787
    %v861 = vpack.c.b16 %v789, %v788
    %v862 = vpack.c.b16 %v790, %v790
    %v863 = vpack.c.b16 %v792, %v791
    %v864 = vpack.c.b16 %v793, %v793
    %v865 = vpack.c.b16 %v795, %v794
    %v866 = vpack.c.b16 %v796, %v796
    %v867 = vpack.c.b16 %v798, %v797
    %v868 = vpack.c.b16 %v799, %v799
    %v869 = vpack.c.b16 %v801, %v800
    %v870 = vpack.c.b16 %v802, %v802
    %v871 = vpack.c.b16 %v804, %v803
    %v872 = vpack.c.b16 %v805, %v805
    %v873 = vpack.c.b16 %v807, %v806
    %v874 = vpack.c.b16 %v808, %v808
    %v875 = vpack.c.b16 %v810, %v809
    %v876 = vpack.c.b16 %v811, %v811
    %v877 = vpack.c.b16 %v813, %v812
    %v878 = vpack.c.b16 %v814, %v814
    %943 = vst [vmem:[#allocation7] sm:$0xff] %v815
    %944 = vst [vmem:[#allocation7 + $0x8] sm:$0xf] %v816
    %945 = vst [vmem:[#allocation7 + $0xc] sm:$0xff] %v817
    %946 = vst [vmem:[#allocation7 + $0x14] sm:$0xf] %v818
    %947 = vst [vmem:[#allocation7 + $0x18] sm:$0xff] %v819
    %948 = vst [vmem:[#allocation7 + $0x20] sm:$0xf] %v820
    %949 = vst [vmem:[#allocation7 + $0x24] sm:$0xff] %v821
    %950 = vst [vmem:[#allocation7 + $0x2c] sm:$0xf] %v822
    %951 = vst [vmem:[#allocation7 + $0x30] sm:$0xff] %v823
    %952 = vst [vmem:[#allocation7 + $0x38] sm:$0xf] %v824
    %953 = vst [vmem:[#allocation7 + $0x3c] sm:$0xff] %v825
    %954 = vst [vmem:[#allocation7 + $0x44] sm:$0xf] %v826
    %955 = vst [vmem:[#allocation7 + $0x48] sm:$0xff] %v827
    %956 = vst [vmem:[#allocation7 + $0x50] sm:$0xf] %v828
    %957 = vst [vmem:[#allocation7 + $0x54] sm:$0xff] %v829
    %958 = vst [vmem:[#allocation7 + $0x5c] sm:$0xf] %v830
    %959 = vst [vmem:[#allocation7 + $0x60] sm:$0xff] %v831
    %960 = vst [vmem:[#allocation7 + $0x68] sm:$0xf] %v832
    %961 = vst [vmem:[#allocation7 + $0x6c] sm:$0xff] %v833
    %962 = vst [vmem:[#allocation7 + $0x74] sm:$0xf] %v834
    %963 = vst [vmem:[#allocation7 + $0x78] sm:$0xff] %v835
    %964 = vst [vmem:[#allocation7 + $0x80] sm:$0xf] %v836
    %965 = vst [vmem:[#allocation7 + $0x84] sm:$0xff] %v837
    %966 = vst [vmem:[#allocation7 + $0x8c] sm:$0xf] %v838
    %967 = vst [vmem:[#allocation7 + $0x90] sm:$0xff] %v839
    %968 = vst [vmem:[#allocation7 + $0x98] sm:$0xf] %v840
    %969 = vst [vmem:[#allocation7 + $0x9c] sm:$0xff] %v841
    %970 = vst [vmem:[#allocation7 + $0xa4] sm:$0xf] %v842
    %971 = vst [vmem:[#allocation7 + $0xa8] sm:$0xff] %v843
    %972 = vst [vmem:[#allocation7 + $0xb0] sm:$0xf] %v844
    %973 = vst [vmem:[#allocation7 + $0xb4] sm:$0xff] %v845
    %974 = vst [vmem:[#allocation7 + $0xbc] sm:$0xf] %v846
    %975 = vst [vmem:[#allocation7 + $0xc0] sm:$0xff] %v847
    %976 = vst [vmem:[#allocation7 + $0xc8] sm:$0xf] %v848
    %977 = vst [vmem:[#allocation7 + $0xcc] sm:$0xff] %v849
    %978 = vst [vmem:[#allocation7 + $0xd4] sm:$0xf] %v850
    %979 = vst [vmem:[#allocation7 + $0xd8] sm:$0xff] %v851
    %980 = vst [vmem:[#allocation7 + $0xe0] sm:$0xf] %v852
    %981 = vst [vmem:[#allocation7 + $0xe4] sm:$0xff] %v853
    %982 = vst [vmem:[#allocation7 + $0xec] sm:$0xf] %v854
    %983 = vst [vmem:[#allocation7 + $0xf0] sm:$0xff] %v855
    %984 = vst [vmem:[#allocation7 + $0xf8] sm:$0xf] %v856
    %985 = vst [vmem:[#allocation7 + $0xfc] sm:$0xff] %v857
    %986 = vst [vmem:[#allocation7 + $0x104] sm:$0xf] %v858
    %987 = vst [vmem:[#allocation7 + $0x108] sm:$0xff] %v859
    %988 = vst [vmem:[#allocation7 + $0x110] sm:$0xf] %v860
    %989 = vst [vmem:[#allocation7 + $0x114] sm:$0xff] %v861
    %990 = vst [vmem:[#allocation7 + $0x11c] sm:$0xf] %v862
    %991 = vst [vmem:[#allocation7 + $0x120] sm:$0xff] %v863
    %992 = vst [vmem:[#allocation7 + $0x128] sm:$0xf] %v864
    %993 = vst [vmem:[#allocation7 + $0x12c] sm:$0xff] %v865
    %994 = vst [vmem:[#allocation7 + $0x134] sm:$0xf] %v866
    %995 = vst [vmem:[#allocation7 + $0x138] sm:$0xff] %v867
    %996 = vst [vmem:[#allocation7 + $0x140] sm:$0xf] %v868
    %997 = vst [vmem:[#allocation7 + $0x144] sm:$0xff] %v869
    %998 = vst [vmem:[#allocation7 + $0x14c] sm:$0xf] %v870
    %999 = vst [vmem:[#allocation7 + $0x150] sm:$0xff] %v871
    %1000 = vst [vmem:[#allocation7 + $0x158] sm:$0xf] %v872
    %1001 = vst [vmem:[#allocation7 + $0x15c] sm:$0xff] %v873
    %1002 = vst [vmem:[#allocation7 + $0x164] sm:$0xf] %v874
    %1003 = vst [vmem:[#allocation7 + $0x168] sm:$0xff] %v875
    %1004 = vst [vmem:[#allocation7 + $0x170] sm:$0xf] %v876
    %1005 = vst [vmem:[#allocation7 + $0x174] sm:$0xff] %v877
    %1006 = vst [vmem:[#allocation7 + $0x17c] sm:$0xf] %v878
    // Predicated region
    $region22: #{tpu_custom_call.1} parent=1 // pred_check
      _
    $region23: #{tpu_custom_call.1} parent=1 // pred_check_branch
      %1008 = sbr.rel (0) target = $region25
    $region24: #{tpu_custom_call.1} parent=1 // pred_region
      %s1010 = ssub.s32 6144, 6144
      %1011 = vsyncadd [#allocation4], %s1010
      %s1012 = sshll.u32 [#allocation7], 4
      %s1013 = int_to_ptr.vmem [resolvable:$true] %s1012
      %1018 = dma.vmem_to_hbm [thread:$0]  %s1013, 6144, %s3, [#allocation4], 192, 192, 12
    $region25: #{tpu_custom_call.1} parent=1 // pred_fallthru
      _
    // Predicated region
    $region26: #{tpu_custom_call.1} parent=1 // pred_check
      _
    $region27: #{tpu_custom_call.1} parent=1 // pred_check_branch
      %1020 = sbr.rel (0) target = $region29
    $region28: #{tpu_custom_call.1} parent=1 // pred_region
      %1021 = dma.done [#allocation4], 6144
    $region29: #{tpu_custom_call.1} parent=1 // pred_fallthru
      _
    %1022 = vsyncpa [#allocation3], 1
    %1023 = vsyncpa [#allocation6], 1
    %1024 = vsyncpa [#allocation4], 1

</llo_original>
